<compile_context>
chip_gen: v7x
topology: tpu7x:2x2x1
jax: 0.10.0
libtpu: 0.0.40
codegen_flags: <defaults>
</compile_context>

<pallas_src>
import functools

import jax
import jax.numpy as jnp
import numpy as np
from jax import lax
from jax.experimental import pallas as pl
from jax.experimental.pallas import tpu as pltpu

EPS = 1e-32
LANE = 128            # padded lane width for hidden1 / packed [mean|std]
_MIB = 1024 * 1024


def _round_up(x, m):
    return ((x + m - 1) // m) * m


def _pick_tile(dim, cap, mult):
    """Largest tile <= cap that divides dim and is a multiple of mult.

    Falls back to the full dim (always a legal TPU block size)."""
    cap = max(cap, mult)
    if dim <= cap:
        return dim
    t = (cap // mult) * mult
    while t >= mult:
        if dim % t == 0:
            return t
        t -= mult
    return dim


def _pad2(x, rows, cols):
    r, c = x.shape
    if r == rows and c == cols:
        return x
    return jnp.pad(x, ((0, rows - r), (0, cols - c)))


def _vmem_budget(buffer_bytes):
    """Scoped-VMEM limit from the actual buffer footprint (+headroom), v7x-safe."""
    return int(min(40 * _MIB, max(8 * _MIB, 2 * buffer_bytes)))


# ---------------------------------------------------------------------------
# Layer 1 (fused): hw12 = relu(adj @ (X @ W0)) @ [W1|W2]
# Grid = (row tiles, K tiles); K innermost with a VMEM accumulator.
# X@W0 is recomputed per row tile (negligible, K=D tiny); W0/W12 are resident.
# ---------------------------------------------------------------------------
def _layer1_kernel(adj_ref, x_ref, w0_ref, w12_ref, o_ref, acc_ref):
    k = pl.program_id(1)

    @pl.when(k == 0)
    def _():
        acc_ref[...] = jnp.zeros_like(acc_ref)

    # Form the B tile on the fly: (tk, LANE) = x_tile @ W0.
    b = jnp.dot(x_ref[...], w0_ref[...], preferred_element_type=jnp.float32)
    acc_ref[...] += jnp.dot(adj_ref[...], b.astype(adj_ref.dtype),
                            preferred_element_type=jnp.float32)

    @pl.when(k == pl.num_programs(1) - 1)
    def _():
        hidden = jnp.maximum(acc_ref[...], 0.0)                   # base_gcn relu
        # Fused gcn_mean / gcn_stddev input projection: hidden @ [W1|W2].
        o_ref[...] = jnp.dot(hidden, w12_ref[...],
                             preferred_element_type=jnp.float32
                             ).astype(o_ref.dtype)


def _gcn_layer1(adj_bf, x, w0p, w12p, *, tm, tk):
    n = adj_bf.shape[0]
    d = x.shape[1]
    grid = (n // tm, n // tk)
    buf_bytes = (2 * tm * tk * 2          # adj tiles (bf16, double buffered)
                 + 2 * tk * d * 4         # x tiles
                 + 2 * d * LANE * 4       # resident W0
                 + 2 * LANE * LANE * 4    # resident W12
                 + 2 * tm * LANE * 2      # output tiles (bf16)
                 + tm * LANE * 4)         # accumulator scratch
    return pl.pallas_call(
        _layer1_kernel,
        out_shape=jax.ShapeDtypeStruct((n, LANE), jnp.bfloat16),
        grid_spec=pltpu.PrefetchScalarGridSpec(
            num_scalar_prefetch=0,
            grid=grid,
            in_specs=[
                pl.BlockSpec((tm, tk), lambda i, k: (i, k)),      # adj (streamed)
                pl.BlockSpec((tk, d), lambda i, k: (k, 0)),       # X (streamed w/ K)
                pl.BlockSpec((d, LANE), lambda i, k: (0, 0)),     # W0 (resident)
                pl.BlockSpec((LANE, LANE), lambda i, k: (0, 0)),  # W12 (resident)
            ],
            out_specs=pl.BlockSpec((tm, LANE), lambda i, k: (i, 0)),
            scratch_shapes=[pltpu.VMEM((tm, LANE), jnp.float32)],
        ),
        compiler_params=pltpu.CompilerParams(
            dimension_semantics=("parallel", "arbitrary"),
            vmem_limit_bytes=_vmem_budget(buf_bytes),
        ),
    )(adj_bf, x, w0p, w12p)


# ---------------------------------------------------------------------------
# Layer 2: ms = clamp(adj @ hw12); also emits Z = ms with lanes >= h2 zeroed.
# The (N,128) B operand stays resident in VMEM and is sliced per K step.
# ---------------------------------------------------------------------------
def _layer2_kernel(adj_ref, b_ref, ms_ref, z_ref, acc_ref, *, tk, h2):
    k = pl.program_id(1)

    @pl.when(k == 0)
    def _():
        acc_ref[...] = jnp.zeros_like(acc_ref)

    start = pl.multiple_of(k * tk, tk)
    b = b_ref[pl.ds(start, tk), :]                                # resident B slice
    acc_ref[...] += jnp.dot(adj_ref[...], b,
                            preferred_element_type=jnp.float32)

    @pl.when(k == pl.num_programs(1) - 1)
    def _():
        ms = acc_ref[...]
        ms = jnp.where(ms < EPS, EPS, ms)                         # clamp mean & std
        ms_ref[...] = ms
        lanes = lax.broadcasted_iota(jnp.int32, ms.shape, 1)
        z_ref[...] = jnp.where(lanes < h2, ms, 0.0)               # mean lanes only


def _gcn_layer2(adj_bf, hw12_bf, *, tm, tk, h2):
    n = adj_bf.shape[0]
    grid = (n // tm, n // tk)
    buf_bytes = (2 * tm * tk * 2          # adj tiles
                 + 2 * n * LANE * 2       # resident hw12 (bf16)
                 + 4 * tm * LANE * 4      # 2 f32 output tiles, double buffered
                 + tm * LANE * 4)         # accumulator
    return pl.pallas_call(
        functools.partial(_layer2_kernel, tk=tk, h2=h2),
        out_shape=(jax.ShapeDtypeStruct((n, LANE), jnp.float32),
                   jax.ShapeDtypeStruct((n, LANE), jnp.float32)),
        grid_spec=pltpu.PrefetchScalarGridSpec(
            num_scalar_prefetch=0,
            grid=grid,
            in_specs=[
                pl.BlockSpec((tm, tk), lambda i, k: (i, k)),      # adj (streamed)
                pl.BlockSpec((n, LANE), lambda i, k: (0, 0)),     # hw12 (resident)
            ],
            out_specs=(pl.BlockSpec((tm, LANE), lambda i, k: (i, 0)),
                       pl.BlockSpec((tm, LANE), lambda i, k: (i, 0))),
            scratch_shapes=[pltpu.VMEM((tm, LANE), jnp.float32)],
        ),
        compiler_params=pltpu.CompilerParams(
            dimension_semantics=("parallel", "arbitrary"),
            vmem_limit_bytes=_vmem_budget(buf_bytes),
        ),
    )(adj_bf, hw12_bf)


# ---------------------------------------------------------------------------
# Decode: A_pred = sigmoid(Z @ Z.T). Z (already mean-lane masked) is resident
# in VMEM; both operand tiles are sliced from it, so nothing is re-streamed.
# ---------------------------------------------------------------------------
def _decode_kernel(z_ref, o_ref, *, tm, tn):
    i = pl.program_id(0)
    j = pl.program_id(1)
    zi = z_ref[pl.ds(pl.multiple_of(i * tm, tm), tm), :]
    zj = z_ref[pl.ds(pl.multiple_of(j * tn, tn), tn), :]
    logits = lax.dot_general(zi, zj,
                             dimension_numbers=(((1,), (1,)), ((), ())),
                             preferred_element_type=jnp.float32)
    o_ref[...] = jax.nn.sigmoid(logits)


def dot_product_decode(z, *, tm, tn):
    n = z.shape[0]
    grid = (n // tm, n // tn)
    buf_bytes = 2 * n * LANE * 4 + 2 * tm * tn * 4
    return pl.pallas_call(
        functools.partial(_decode_kernel, tm=tm, tn=tn),
        out_shape=jax.ShapeDtypeStruct((n, n), jnp.float32),
        grid_spec=pltpu.PrefetchScalarGridSpec(
            num_scalar_prefetch=0,
            grid=grid,
            in_specs=[pl.BlockSpec((n, LANE), lambda i, j: (0, 0))],   # Z resident
            out_specs=pl.BlockSpec((tm, tn), lambda i, j: (i, j)),
        ),
        compiler_params=pltpu.CompilerParams(
            dimension_semantics=("parallel", "parallel"),
            vmem_limit_bytes=_vmem_budget(buf_bytes),
        ),
    )(z)


# ---------------------------------------------------------------------------
# Full VGAE forward.
# ---------------------------------------------------------------------------
def vgae_forward(x, adj, w0, w1, w2):
    n, d = x.shape
    h1 = w0.shape[1]
    h2 = w1.shape[1]
    assert h1 <= LANE and 2 * h2 <= LANE

    # Pad node count to a multiple of 128 (zero rows/cols are inert) so tile
    # selection never degenerates; slice everything back at the end.
    n_pad = _round_up(n, 128)
    x_p = _pad2(x, n_pad, d)
    adj_bf = _pad2(adj, n_pad, n_pad).astype(jnp.bfloat16)

    # Zero-pad weight output widths to 128 lanes; fuse W1/W2 into one W12.
    w0p = _pad2(w0, d, LANE)                                      # (D, 128)
    w12p = _pad2(jnp.concatenate([w1, w2], axis=1), LANE, LANE)   # (128, 128)

    # Tile selection: big K tiles; row tiles capped at N/2 so the parallel row
    # axis keeps >= 2 tiles (v7x megacore); multiples of 16 for bf16 blocks.
    tm = _pick_tile(n_pad, min(512, max(n_pad // 2, 16)), 16)
    tk = _pick_tile(n_pad, 1024, 128)

    hw12 = _gcn_layer1(adj_bf, x_p, w0p, w12p, tm=tm, tk=tk)      # (Np, 128) bf16
    ms, z = _gcn_layer2(adj_bf, hw12, tm=tm, tk=tk, h2=h2)        # (Np, 128) f32 x2

    tmd = _pick_tile(n_pad, min(512, max(n_pad // 2, 8)), 8)
    tnd = _pick_tile(n_pad, 512, 128)
    a_pred_p = dot_product_decode(z, tm=tmd, tn=tnd)              # (Np, Np)

    a_pred = a_pred_p[:n, :n]
    mean = ms[:n, :h2]
    std = ms[:n, h2:2 * h2]
    return a_pred, mean, std


# ---------------------------------------------------------------------------
# Reference + test harness.
# ---------------------------------------------------------------------------
def glorot_init(key, input_dim, output_dim):
    init_range = np.sqrt(6.0 / (input_dim + output_dim))
    u = jax.random.uniform(key, (input_dim, output_dim), dtype=jnp.float32)
    return u * 2.0 * init_range - init_range


def reference_forward(x, adj, w0, w1, w2):
    hi = lax.Precision.HIGHEST
    hidden = jnp.maximum(jnp.dot(adj, jnp.dot(x, w0, precision=hi), precision=hi), 0.0)
    mean = jnp.dot(adj, jnp.dot(hidden, w1, precision=hi), precision=hi)
    std = jnp.dot(adj, jnp.dot(hidden, w2, precision=hi), precision=hi)
    mean = jnp.where(mean < EPS, EPS, mean)
    std = jnp.where(std < EPS, EPS, std)
    z = mean
    return jax.nn.sigmoid(jnp.dot(z, z.T, precision=hi)), mean, std


if __name__ == "__main__":
    N = 256           # number of graph nodes (exercises the tiled grid)
    INPUT_DIM = 32    # feature dim
    HIDDEN1 = 32
    HIDDEN2 = 16

    key = jax.random.PRNGKey(0)
    k_x, k_adj, k_w0, k_w1, k_w2 = jax.random.split(key, 5)

    # node features
    x = jax.random.normal(k_x, (N, INPUT_DIM), dtype=jnp.float32)

    # symmetric, degree-normalized dense adjacency (deterministic)
    a = (jax.random.uniform(k_adj, (N, N)) < 0.05).astype(jnp.float32)
    a = jnp.maximum(a, a.T) + jnp.eye(N, dtype=jnp.float32)
    deg = jnp.sum(a, axis=1)
    d_inv_sqrt = 1.0 / jnp.sqrt(deg)
    adj = a * d_inv_sqrt[:, None] * d_inv_sqrt[None, :]

    # glorot-initialized GCN weights (deterministic)
    w0 = glorot_init(k_w0, INPUT_DIM, HIDDEN1)
    w1 = glorot_init(k_w1, HIDDEN1, HIDDEN2)
    w2 = glorot_init(k_w2, HIDDEN1, HIDDEN2)

    a_pred, mean, std = vgae_forward(x, adj, w0, w1, w2)
    jax.block_until_ready((a_pred, mean, std))

    a_ref, m_ref, s_ref = reference_forward(x, adj, w0, w1, w2)
    # Tolerances loosened for bf16 adj / bf16 hw12 on the MXU (f32 accumulation)
    # vs. the Precision.HIGHEST f32 reference.
    np.testing.assert_allclose(np.asarray(a_pred), np.asarray(a_ref),
                               rtol=2e-2, atol=2e-3)
    np.testing.assert_allclose(np.asarray(mean), np.asarray(m_ref),
                               rtol=5e-2, atol=1e-2)
    np.testing.assert_allclose(np.asarray(std), np.asarray(s_ref),
                               rtol=5e-2, atol=1e-2)

    print("KERNEL_OK")
</pallas_src>

<mosaic_0001>
module attributes {stable_mosaic.version = 11 : i64} {
  func.func @_layer1_kernel(%arg0: i32, %arg1: i32, %arg2: memref<128x256xbf16, #tpu.memory_space<vmem>>, %arg3: memref<256x32xf32, #tpu.memory_space<vmem>>, %arg4: memref<32x128xf32, #tpu.memory_space<vmem>>, %arg5: memref<128x128xf32, #tpu.memory_space<vmem>>, %arg6: memref<128x128xbf16, #tpu.memory_space<vmem>>, %arg7: memref<128x128xf32, #tpu.memory_space<vmem>>) attributes {dimension_semantics = [#tpu.dimension_semantics<parallel>, #tpu.dimension_semantics<arbitrary>], iteration_bounds = array<i64: 2, 1>, scalar_prefetch = 0 : i64, scratch_operands = 1 : i64, tpu.core_type = #tpu.core_type<tc>, window_params = [{transform_indices = @transform_0, window_bounds = array<i64: 128, 256>}, {transform_indices = @transform_1, window_bounds = array<i64: 256, 32>}, {pipeline_mode = #tpu.pipeline_mode<synchronous>, transform_indices = @transform_2, window_bounds = array<i64: 32, 128>}, {pipeline_mode = #tpu.pipeline_mode<synchronous>, transform_indices = @transform_3, window_bounds = array<i64: 128, 128>}, {transform_indices = @transform_4, window_bounds = array<i64: 128, 128>}]} {
    %c0_i32 = arith.constant 0 : i32
    %0 = arith.cmpi eq, %arg1, %c0_i32 : i32
    %1 = arith.extui %0 : i1 to i32
    %c0_i32_0 = arith.constant 0 : i32
    %2 = arith.cmpi ne, %1, %c0_i32_0 : i32
    scf.if %2 {
      %cst_13 = arith.constant 0.000000e+00 : f32
      %15 = vector.broadcast %cst_13 : f32 to vector<128x128xf32>
      %c0_14 = arith.constant 0 : index
      %c0_15 = arith.constant 0 : index
      %16 = vector.load %arg7[%c0_14, %c0_15] : memref<128x128xf32, #tpu.memory_space<vmem>>, vector<128x128xf32>
      tpu.vector_store %arg7[%c0_14, %c0_15], %15 {strides = array<i32>} : memref<128x128xf32, #tpu.memory_space<vmem>>, vector<128x128xf32>,
    } else {
    }
    %c0 = arith.constant 0 : index
    %c0_1 = arith.constant 0 : index
    %3 = vector.load %arg3[%c0, %c0_1] : memref<256x32xf32, #tpu.memory_space<vmem>>, vector<256x32xf32>
    %c0_2 = arith.constant 0 : index
    %c0_3 = arith.constant 0 : index
    %4 = vector.load %arg4[%c0_2, %c0_3] : memref<32x128xf32, #tpu.memory_space<vmem>>, vector<32x128xf32>
    %cst = arith.constant dense<0.000000e+00> : vector<256x128xf32>
    %5 = tpu.matmul %3, %4, %cst {dimension_numbers = #tpu.dot_dimension_numbers<[1], [0], [0], [1], [0, 0, 1, 1], [], []>} : vector<256x32xf32>, vector<32x128xf32>, vector<256x128xf32> -> vector<256x128xf32>
    %c0_4 = arith.constant 0 : index
    %c0_5 = arith.constant 0 : index
    %6 = vector.load %arg7[%c0_4, %c0_5] : memref<128x128xf32, #tpu.memory_space<vmem>>, vector<128x128xf32>
    %c0_6 = arith.constant 0 : index
    %c0_7 = arith.constant 0 : index
    %7 = vector.load %arg2[%c0_6, %c0_7] : memref<128x256xbf16, #tpu.memory_space<vmem>>, vector<128x256xbf16>
    %8 = arith.truncf %5 : vector<256x128xf32> to vector<256x128xbf16>
    %cst_8 = arith.constant dense<0.000000e+00> : vector<128x128xf32>
    %9 = tpu.matmul %7, %8, %cst_8 {dimension_numbers = #tpu.dot_dimension_numbers<[1], [0], [0], [1], [0, 0, 1, 1], [], []>} : vector<128x256xbf16>, vector<256x128xbf16>, vector<128x128xf32> -> vector<128x128xf32>
    %10 = arith.addf %6, %9 : vector<128x128xf32>
    %c0_9 = arith.constant 0 : index
    %c0_10 = arith.constant 0 : index
    %11 = vector.load %arg7[%c0_9, %c0_10] : memref<128x128xf32, #tpu.memory_space<vmem>>, vector<128x128xf32>
    tpu.vector_store %arg7[%c0_9, %c0_10], %10 {strides = array<i32>} : memref<128x128xf32, #tpu.memory_space<vmem>>, vector<128x128xf32>,
    %c0_i32_11 = arith.constant 0 : i32
    %12 = arith.cmpi eq, %arg1, %c0_i32_11 : i32
    %13 = arith.extui %12 : i1 to i32
    %c0_i32_12 = arith.constant 0 : i32
    %14 = arith.cmpi ne, %13, %c0_i32_12 : i32
    scf.if %14 {
      %c0_13 = arith.constant 0 : index
      %c0_14 = arith.constant 0 : index
      %15 = vector.load %arg7[%c0_13, %c0_14] : memref<128x128xf32, #tpu.memory_space<vmem>>, vector<128x128xf32>
      %cst_15 = arith.constant 0.000000e+00 : f32
      %16 = vector.broadcast %cst_15 : f32 to vector<128x128xf32>
      %17 = arith.maximumf %15, %16 : vector<128x128xf32>
      %c0_16 = arith.constant 0 : index
      %c0_17 = arith.constant 0 : index
      %18 = vector.load %arg5[%c0_16, %c0_17] : memref<128x128xf32, #tpu.memory_space<vmem>>, vector<128x128xf32>
      %cst_18 = arith.constant dense<0.000000e+00> : vector<128x128xf32>
      %19 = tpu.matmul %17, %18, %cst_18 {dimension_numbers = #tpu.dot_dimension_numbers<[1], [0], [0], [1], [0, 0, 1, 1], [], []>} : vector<128x128xf32>, vector<128x128xf32>, vector<128x128xf32> -> vector<128x128xf32>
      %20 = arith.truncf %19 : vector<128x128xf32> to vector<128x128xbf16>
      %c0_19 = arith.constant 0 : index
      %c0_20 = arith.constant 0 : index
      %21 = vector.load %arg6[%c0_19, %c0_20] : memref<128x128xbf16, #tpu.memory_space<vmem>>, vector<128x128xbf16>
      tpu.vector_store %arg6[%c0_19, %c0_20], %20 {strides = array<i32>} : memref<128x128xbf16, #tpu.memory_space<vmem>>, vector<128x128xbf16>,
    } else {
    }
    return
  }
  func.func @transform_0(%arg0: i32, %arg1: i32) -> (i32, i32) {
    %c0_i32 = arith.constant 0 : i32
    return %arg0, %arg1 : i32, i32
  }
  func.func @transform_1(%arg0: i32, %arg1: i32) -> (i32, i32) {
    %c0_i32 = arith.constant 0 : i32
    %c0_i32_0 = arith.constant 0 : i32
    return %arg1, %c0_i32 : i32, i32
  }
  func.func @transform_2(%arg0: i32, %arg1: i32) -> (i32, i32) {
    %c0_i32 = arith.constant 0 : i32
    %c0_i32_0 = arith.constant 0 : i32
    %c0_i32_1 = arith.constant 0 : i32
    return %c0_i32, %c0_i32_0 : i32, i32
  }
  func.func @transform_3(%arg0: i32, %arg1: i32) -> (i32, i32) {
    %c0_i32 = arith.constant 0 : i32
    %c0_i32_0 = arith.constant 0 : i32
    %c0_i32_1 = arith.constant 0 : i32
    return %c0_i32, %c0_i32_0 : i32, i32
  }
  func.func @transform_4(%arg0: i32, %arg1: i32) -> (i32, i32) {
    %c0_i32 = arith.constant 0 : i32
    %c0_i32_0 = arith.constant 0 : i32
    return %arg0, %c0_i32 : i32, i32
  }
}

</mosaic_0001>

<llo_original>
// kernel: tpu_custom_call.1
$region0: #{tpu_custom_call.1}
  #allocation0 [shape = 'u32[]', space=smem, size = 0x4, offset = 0x4, fixed_abs, tag = 'smem constant byte address 0x4 - core index']
  #allocation1 [shape = 'u32[144,128]{1,0:T(1,128)}', space=vmem, size = 0x12000, scoped, tag = 'internal scratch']
  #allocation2 [shape = 'f32[128,128]{1,0:T(8,128)}', space=vmem, size = 0x10000, scoped, tag = 'scratch operand']
  %s0 = inlined_call_operand.vmem [shape: bf16[256,256], index: 0, kind: input, shape index: {}]
  %s1 = inlined_call_operand.vmem [shape: f32[256,32], index: 1, kind: input, shape index: {}]
  %s2 = inlined_call_operand.vmem [shape: f32[32,128], index: 2, kind: input, shape index: {}]
  %s3 = inlined_call_operand.hbm [shape: f32[128,128], index: 3, kind: input, shape index: {}]
  %s4 = inlined_call_operand.hbm [shape: bf16[256,128], index: 4, kind: output, shape index: {}]
  %s5 = sld [smem:[#allocation0]]
  $region61: #{tpu_custom_call.1} parent=0
    _
  %s7 = ssub.s32 1, %s5
  %s8 = scalar_select 0, %s7, %s5
  $region1: #{tpu_custom_call.1} parent=0
    #allocation3 [shape = 'u8[65536]{0}', space=vmem, size = 0x10000, scoped, tag = 'input window, operand 3, single buffered']
    #allocation4 [shape = 's32[2]{0}', space=sflag, size = 0x8, scoped, tag = 'scoped memory for tpu_custom_call.1']
    #allocation5 [shape = 's32[2]{0}', space=sflag, size = 0x8, scoped, tag = 'scoped memory for tpu_custom_call.1']
    #allocation6 [shape = 'u8[65536]{0}', space=vmem, size = 0x10000, scoped, tag = 'output window, operand 0']
    %9 = vsyncpa [#allocation4], 0
    %10 = vsyncpa [#allocation5], 0
    %s11 = scalar_lea.sflag [#allocation5], 1
    %12 = vsyncpa %s11, 0
    loop: start=0, step=1, limit=4
    $region2: #{tpu_custom_call.1} parent=1 // loop_pre_header
      _
    $region3: #{tpu_custom_call.1} parent=1 // loop_header
      %s14 = sphi 0, %s18
      %p15 = scmp.ge.s32.totalorder %s14, 4
      %s21 = sphi 0, %s33
      %s22 = sphi 0, %s29
      %s23 = sphi 0, %s21
      %s24 = sphi 0, %s22
      %s25 = sphi 0, %s23
      %s26 = sphi 0, %s24
      %s38 = sphi 0, %s40
      %s41 = sphi 0, %s38
      %s42 = sphi 0, %s41
      %s58 = sphi 0, %s42
      %s64 = sphi 0, %s66
      %s67 = sphi 0, %s64
      %s68 = sphi 0, %s67
      %s84 = sphi 0, %s68
      %s88 = sphi 0, %s88
      %s90 = sphi 0, %s88
      %s91 = sphi 0, %s90
      %s105 = sphi 0, %s91
      %s109 = sphi 0, %s109
      %s111 = sphi 0, %s109
      %s112 = sphi 0, %s111
      %s126 = sphi 0, %s112
      %s132 = sphi 0, %s134
      %s135 = sphi 0, %s132
      %s136 = sphi 0, %s135
      %s152 = sphi 0, %s136
    $region4: #{tpu_custom_call.1} parent=1 // loop_header_branch
      %17 = sbr.rel (%p15) target = $region8
    $region5: #{tpu_custom_call.1} parent=1 // loop_body
      %s19 = ssub.s32 %s14, 1
      %s20 = ssub.s32 %s14, 2
      %s27 = sadd.s32 1, %s22
      %p28 = scmp.ge.s32.totalorder %s27, 1
      %s29 = scalar_select %p28, 0, %s27
      %s30 = sadd.s32 1, %s21
      %s31 = scalar_select %p28, %s30, %s21
      %p32 = scmp.ge.s32.totalorder %s31, 2
      %s33 = scalar_select %p32, 0, %s31
      %s34 = ssub.s32 %s21, %s33
      %s35 = ssub.s32 %s22, %s29
      %s36 = sor.u32 %s34, %s35
      %p37 = scmp.eq.s32.totalorder %s36, 0
      %s39 = sadd.s32 %s38, 1
      %s40 = scalar_select %p37, %s38, %s39
      %p43 = pneg %p37
      %p44 = scmp.eq.s32.totalorder %s14, 1
      %p45 = por %p43, %p44
      %p46 = scmp.ne.s32.totalorder %s38, %s41
      %p47 = scmp.eq.s32.totalorder %s14, 0
      %p48 = por %p46, %p47
      %p49 = scmp.ne.s32.totalorder %s38, %s41
      %p50 = scmp.eq.s32.totalorder %s19, 1
      %p51 = por %p49, %p50
      %p52 = scmp.ne.s32.totalorder %s41, %s42
      %p53 = scmp.eq.s32.totalorder %s19, 0
      %p54 = por %p52, %p53
      %p55 = scmp.ne.s32.totalorder %s41, %s42
      %p56 = scmp.eq.s32.totalorder %s20, 1
      %p57 = por %p55, %p56
      %p59 = scmp.ne.s32.totalorder %s42, %s58
      %p60 = scmp.eq.s32.totalorder %s20, 0
      %p61 = por %p59, %p60
      %s62 = ssub.s32 %s22, %s29
      %p63 = scmp.eq.s32.totalorder %s62, 0
      %s65 = sadd.s32 %s64, 1
      %s66 = scalar_select %p63, %s64, %s65
      %p69 = pneg %p63
      %p70 = scmp.eq.s32.totalorder %s14, 1
      %p71 = por %p69, %p70
      %p72 = scmp.ne.s32.totalorder %s64, %s67
      %p73 = scmp.eq.s32.totalorder %s14, 0
      %p74 = por %p72, %p73
      %p75 = scmp.ne.s32.totalorder %s64, %s67
      %p76 = scmp.eq.s32.totalorder %s19, 1
      %p77 = por %p75, %p76
      %p78 = scmp.ne.s32.totalorder %s67, %s68
      %p79 = scmp.eq.s32.totalorder %s19, 0
      %p80 = por %p78, %p79
      %p81 = scmp.ne.s32.totalorder %s67, %s68
      %p82 = scmp.eq.s32.totalorder %s20, 1
      %p83 = por %p81, %p82
      %p85 = scmp.ne.s32.totalorder %s68, %s84
      %p86 = scmp.eq.s32.totalorder %s20, 0
      %p87 = por %p85, %p86
      %s89 = sadd.s32 %s88, 1
      %p92 = scmp.eq.s32.totalorder %s14, 1
      %p93 = scmp.ne.s32.totalorder %s88, %s90
      %p94 = scmp.eq.s32.totalorder %s14, 0
      %p95 = por %p93, %p94
      %p96 = scmp.ne.s32.totalorder %s88, %s90
      %p97 = scmp.eq.s32.totalorder %s19, 1
      %p98 = por %p96, %p97
      %p99 = scmp.ne.s32.totalorder %s90, %s91
      %p100 = scmp.eq.s32.totalorder %s19, 0
      %p101 = por %p99, %p100
      %p102 = scmp.ne.s32.totalorder %s90, %s91
      %p103 = scmp.eq.s32.totalorder %s20, 1
      %p104 = por %p102, %p103
      %p106 = scmp.ne.s32.totalorder %s91, %s105
      %p107 = scmp.eq.s32.totalorder %s20, 0
      %p108 = por %p106, %p107
      %s110 = sadd.s32 %s109, 1
      %p113 = scmp.eq.s32.totalorder %s14, 1
      %p114 = scmp.ne.s32.totalorder %s109, %s111
      %p115 = scmp.eq.s32.totalorder %s14, 0
      %p116 = por %p114, %p115
      %p117 = scmp.ne.s32.totalorder %s109, %s111
      %p118 = scmp.eq.s32.totalorder %s19, 1
      %p119 = por %p117, %p118
      %p120 = scmp.ne.s32.totalorder %s111, %s112
      %p121 = scmp.eq.s32.totalorder %s19, 0
      %p122 = por %p120, %p121
      %p123 = scmp.ne.s32.totalorder %s111, %s112
      %p124 = scmp.eq.s32.totalorder %s20, 1
      %p125 = por %p123, %p124
      %p127 = scmp.ne.s32.totalorder %s112, %s126
      %p128 = scmp.eq.s32.totalorder %s20, 0
      %p129 = por %p127, %p128
      %s130 = ssub.s32 %s21, %s33
      %p131 = scmp.eq.s32.totalorder %s130, 0
      %s133 = sadd.s32 %s132, 1
      %s134 = scalar_select %p131, %s132, %s133
      %p137 = pneg %p131
      %p138 = scmp.eq.s32.totalorder %s14, 1
      %p139 = por %p137, %p138
      %p140 = scmp.ne.s32.totalorder %s132, %s135
      %p141 = scmp.eq.s32.totalorder %s14, 0
      %p142 = por %p140, %p141
      %p143 = scmp.ne.s32.totalorder %s132, %s135
      %p144 = scmp.eq.s32.totalorder %s19, 1
      %p145 = por %p143, %p144
      %p146 = scmp.ne.s32.totalorder %s135, %s136
      %p147 = scmp.eq.s32.totalorder %s19, 0
      %p148 = por %p146, %p147
      %p149 = scmp.ne.s32.totalorder %s135, %s136
      %p150 = scmp.eq.s32.totalorder %s20, 1
      %p151 = por %p149, %p150
      %p153 = scmp.ne.s32.totalorder %s136, %s152
      %p154 = scmp.eq.s32.totalorder %s20, 0
      %p155 = por %p153, %p154
      %p156 = scmp.le.s32.totalorder 1, %s14
      %p157 = scmp.lt.s32.totalorder %s14, 3
      %p158 = pnand %p156, %p157
      %p159 = pneg %p158
      // Predicated region
      $region9: #{tpu_custom_call.1} parent=5 // pred_check
        _
      $region10: #{tpu_custom_call.1} parent=5 // pred_check_branch
        %161 = sbr.rel (%p158) target = $region12
      $region11: #{tpu_custom_call.1} parent=5 // pred_region
        %s162 = ssub.s32 %s14, 1
        // Predicated region
        $region13: #{tpu_custom_call.1} parent=11 // pred_check
          %p163 = pneg %p80
        $region14: #{tpu_custom_call.1} parent=11 // pred_check_branch
          %165 = sbr.rel (%p163) target = $region16
        $region15: #{tpu_custom_call.1} parent=11 // pred_region
          %s166 = smul.u32 32, %s24
          %p167 = scmp.lt.s32.totalorder %s166, 31
          %s168 = scalar_select %p167, %s166, 31
          %s169 = smul.addr %s168, 8
          %s170 = scalar_lea.vmem %s1, %s169
          %s171 = smul.u32 32, %s24
        $region16: #{tpu_custom_call.1} parent=11 // pred_fallthru
          _
        // Predicated region
        $region17: #{tpu_custom_call.1} parent=11 // pred_check
          %p172 = pneg %p101
        $region18: #{tpu_custom_call.1} parent=11 // pred_check_branch
          %174 = sbr.rel (%p172) target = $region20
        $region19: #{tpu_custom_call.1} parent=11 // pred_region
          _
        $region20: #{tpu_custom_call.1} parent=11 // pred_fallthru
          _
        // Predicated region
        $region21: #{tpu_custom_call.1} parent=11 // pred_check
          %p175 = pneg %p122
        $region22: #{tpu_custom_call.1} parent=11 // pred_check_branch
          %177 = sbr.rel (%p175) target = $region24
        $region23: #{tpu_custom_call.1} parent=11 // pred_region
          %s179 = ssub.s32 2048, 2048
          %180 = vsyncadd [#allocation4], %s179
          %s181 = sshll.u32 [#allocation3], 4
          %s182 = int_to_ptr.vmem [resolvable:$true] %s181
          %187 = dma.hbm_to_vmem [thread:$0]  %s3, 2048, %s182, [#allocation4], 128, 128, 8
        $region24: #{tpu_custom_call.1} parent=11 // pred_fallthru
          _
      $region12: #{tpu_custom_call.1} parent=5 // pred_fallthru
        _
      %p188 = scmp.lt.s32.totalorder %s14, 2
      // Predicated region
      $region25: #{tpu_custom_call.1} parent=5 // pred_check
        %p189 = pneg %p188
      $region26: #{tpu_custom_call.1} parent=5 // pred_check_branch
        %191 = sbr.rel (%p189) target = $region28
      $region27: #{tpu_custom_call.1} parent=5 // pred_region
        // Predicated region
        $region29: #{tpu_custom_call.1} parent=27 // pred_check
          %p192 = pneg %p48
        $region30: #{tpu_custom_call.1} parent=27 // pred_check_branch
          %194 = sbr.rel (%p192) target = $region32
        $region31: #{tpu_custom_call.1} parent=27 // pred_region
          %s195 = smul.u32 16, %s21
          %s196 = smul.u32 2, %s22
          %p197 = scmp.lt.s32.totalorder %s195, 31
          %s198 = scalar_select %p197, %s195, 31
          %p199 = scmp.lt.s32.totalorder %s196, 1
          %s200 = scalar_select %p199, %s196, 1
          %s201 = smul.addr %s198, 2
          %s202 = sadd.s32 %s200, %s201
          %s203 = smul.addr %s202, 4
          %s204 = scalar_lea.vmem %s0, %s203
          %s205 = smul.u32 16, %s21
          %s206 = smul.u32 2, %s22
        $region32: #{tpu_custom_call.1} parent=27 // pred_fallthru
          _
      $region28: #{tpu_custom_call.1} parent=5 // pred_fallthru
        _
      %p207 = scmp.le.s32.totalorder 1, %s14
      %p208 = scmp.lt.s32.totalorder %s14, 3
      %p209 = pnand %p207, %p208
      %p210 = pneg %p209
      // Predicated region
      $region33: #{tpu_custom_call.1} parent=5 // pred_check
        _
      $region34: #{tpu_custom_call.1} parent=5 // pred_check_branch
        %212 = sbr.rel (%p209) target = $region36
      $region35: #{tpu_custom_call.1} parent=5 // pred_region
        %s213 = ssub.s32 %s14, 1
        // Predicated region
        $region37: #{tpu_custom_call.1} parent=35 // pred_check
          %p214 = pneg %p122
        $region38: #{tpu_custom_call.1} parent=35 // pred_check_branch
          %216 = sbr.rel (%p214) target = $region40
        $region39: #{tpu_custom_call.1} parent=35 // pred_region
          %217 = dma.done [#allocation4], 2048
        $region40: #{tpu_custom_call.1} parent=35 // pred_fallthru
          _
        %s218 = smul.u32 16, %s23
        %s219 = smul.u32 2, %s24
        %p220 = scmp.lt.s32.totalorder %s218, 31
        %s221 = scalar_select %p220, %s218, 31
        %p222 = scmp.lt.s32.totalorder %s219, 1
        %s223 = scalar_select %p222, %s219, 1
        %s224 = smul.addr %s221, 2
        %s225 = sadd.s32 %s223, %s224
        %s226 = smul.addr %s225, 4
        %s227 = scalar_lea.vmem %s0, %s226
        %p228 = pneg %p54
        %p229 = pneg %p51
        %s230 = smul.u32 32, %s24
        %p231 = scmp.lt.s32.totalorder %s230, 31
        %s232 = scalar_select %p231, %s230, 31
        %s233 = smul.addr %s232, 8
        %s234 = scalar_lea.vmem %s1, %s233
        %p235 = pneg %p80
        %p236 = pneg %p77
        %p237 = pneg %p101
        %p238 = pneg %p98
        %p239 = pneg %p122
        %p240 = pneg %p119
        %p241 = pneg %p148
        %p242 = pneg %p145
        %s243 = sand.u32 %s135, 1
        %s244 = scalar_lea.sflag [#allocation5], %s243
        %s245 = sand.u32 %s135, 1
        %s246 = smul.addr %s245, 64
        %s247 = scalar_lea.vmem [#allocation6], %s246
        %s248 = smul.u32 16, %s23
        %s249 = smul.u32 2, %s24
        %p250 = scmp.lt.s32.totalorder %s248, 31
        %s251 = scalar_select %p250, %s248, 31
        %p252 = scmp.lt.s32.totalorder %s249, 1
        %s253 = scalar_select %p252, %s249, 1
        %s254 = smul.addr %s251, 2
        %s255 = sadd.s32 %s253, %s254
        %s256 = smul.addr %s255, 4
        %s257 = scalar_lea.vmem %s0, %s256
        %s258 = smul.u32 16, %s23
        %s259 = smul.u32 2, %s24
        %s260 = smul.u32 32, %s24
        %p261 = scmp.lt.s32.totalorder %s260, 31
        %s262 = scalar_select %p261, %s260, 31
        %s263 = smul.addr %s262, 8
        %s264 = scalar_lea.vmem %s1, %s263
        %s265 = smul.u32 32, %s24
        %s266 = smul.u32 16, %s23
        %p268 = scmp.eq.s32.totalorder %s24, 0
        // Predicated region
        $region41: #{tpu_custom_call.1} parent=35 // pred_check
          %p269 = pneg %p268
        $region42: #{tpu_custom_call.1} parent=35 // pred_check_branch
          %271 = sbr.rel (%p269) target = $region44
        $region43: #{tpu_custom_call.1} parent=35 // pred_region
          %272 = vst [vmem:[#allocation2] sm:$0xff] 0.0
          %273 = vst [vmem:[#allocation2 + $0x8] sm:$0xff] 0.0
          %274 = vst [vmem:[#allocation2 + $0x10] sm:$0xff] 0.0
          %275 = vst [vmem:[#allocation2 + $0x18] sm:$0xff] 0.0
          %276 = vst [vmem:[#allocation2 + $0x20] sm:$0xff] 0.0
          %277 = vst [vmem:[#allocation2 + $0x28] sm:$0xff] 0.0
          %278 = vst [vmem:[#allocation2 + $0x30] sm:$0xff] 0.0
          %279 = vst [vmem:[#allocation2 + $0x38] sm:$0xff] 0.0
          %280 = vst [vmem:[#allocation2 + $0x40] sm:$0xff] 0.0
          %281 = vst [vmem:[#allocation2 + $0x48] sm:$0xff] 0.0
          %282 = vst [vmem:[#allocation2 + $0x50] sm:$0xff] 0.0
          %283 = vst [vmem:[#allocation2 + $0x58] sm:$0xff] 0.0
          %284 = vst [vmem:[#allocation2 + $0x60] sm:$0xff] 0.0
          %285 = vst [vmem:[#allocation2 + $0x68] sm:$0xff] 0.0
          %286 = vst [vmem:[#allocation2 + $0x70] sm:$0xff] 0.0
          %287 = vst [vmem:[#allocation2 + $0x78] sm:$0xff] 0.0
        $region44: #{tpu_custom_call.1} parent=35 // pred_fallthru
          _
        %v288 = vld [vmem:[%s264] sm:$0xff]
        %v289 = vld [vmem:[%s264 + $0x8] sm:$0xff]
        %v290 = vld [vmem:[%s264 + $0x10] sm:$0xff]
        %v291 = vld [vmem:[%s264 + $0x18] sm:$0xff]
        %v292 = vld [vmem:[%s264 + $0x20] sm:$0xff]
        %v293 = vld [vmem:[%s264 + $0x28] sm:$0xff]
        %v294 = vld [vmem:[%s264 + $0x30] sm:$0xff]
        %v295 = vld [vmem:[%s264 + $0x38] sm:$0xff]
        %v296 = vld [vmem:[%s264 + $0x40] sm:$0xff]
        %v297 = vld [vmem:[%s264 + $0x48] sm:$0xff]
        %v298 = vld [vmem:[%s264 + $0x50] sm:$0xff]
        %v299 = vld [vmem:[%s264 + $0x58] sm:$0xff]
        %v300 = vld [vmem:[%s264 + $0x60] sm:$0xff]
        %v301 = vld [vmem:[%s264 + $0x68] sm:$0xff]
        %v302 = vld [vmem:[%s264 + $0x70] sm:$0xff]
        %v303 = vld [vmem:[%s264 + $0x78] sm:$0xff]
        %v304 = vld [vmem:[%s264 + $0x80] sm:$0xff]
        %v305 = vld [vmem:[%s264 + $0x88] sm:$0xff]
        %v306 = vld [vmem:[%s264 + $0x90] sm:$0xff]
        %v307 = vld [vmem:[%s264 + $0x98] sm:$0xff]
        %v308 = vld [vmem:[%s264 + $0xa0] sm:$0xff]
        %v309 = vld [vmem:[%s264 + $0xa8] sm:$0xff]
        %v310 = vld [vmem:[%s264 + $0xb0] sm:$0xff]
        %v311 = vld [vmem:[%s264 + $0xb8] sm:$0xff]
        %v312 = vld [vmem:[%s264 + $0xc0] sm:$0xff]
        %v313 = vld [vmem:[%s264 + $0xc8] sm:$0xff]
        %v314 = vld [vmem:[%s264 + $0xd0] sm:$0xff]
        %v315 = vld [vmem:[%s264 + $0xd8] sm:$0xff]
        %v316 = vld [vmem:[%s264 + $0xe0] sm:$0xff]
        %v317 = vld [vmem:[%s264 + $0xe8] sm:$0xff]
        %v318 = vld [vmem:[%s264 + $0xf0] sm:$0xff]
        %v319 = vld [vmem:[%s264 + $0xf8] sm:$0xff]
        %v320 = vld [vmem:[%s2] sm:$0xff]
        %v321 = vld [vmem:[%s2 + $0x8] sm:$0xff]
        %v322 = vld [vmem:[%s2 + $0x10] sm:$0xff]
        %v323 = vld [vmem:[%s2 + $0x18] sm:$0xff]
        %vm324 = vcmask 261120
        %v326 = vsel %vm324, %v288, 0
        %v329 = vsel %vm324, %v289, 0
        %v332 = vsel %vm324, %v290, 0
        %v335 = vsel %vm324, %v291, 0
        %v338 = vsel %vm324, %v292, 0
        %v341 = vsel %vm324, %v293, 0
        %v344 = vsel %vm324, %v294, 0
        %v347 = vsel %vm324, %v295, 0
        %v350 = vsel %vm324, %v296, 0
        %v353 = vsel %vm324, %v297, 0
        %v356 = vsel %vm324, %v298, 0
        %v359 = vsel %vm324, %v299, 0
        %v362 = vsel %vm324, %v300, 0
        %v365 = vsel %vm324, %v301, 0
        %v368 = vsel %vm324, %v302, 0
        %v371 = vsel %vm324, %v303, 0
        %v374 = vsel %vm324, %v304, 0
        %v377 = vsel %vm324, %v305, 0
        %v380 = vsel %vm324, %v306, 0
        %v383 = vsel %vm324, %v307, 0
        %v386 = vsel %vm324, %v308, 0
        %v389 = vsel %vm324, %v309, 0
        %v392 = vsel %vm324, %v310, 0
        %v395 = vsel %vm324, %v311, 0
        %v398 = vsel %vm324, %v312, 0
        %v401 = vsel %vm324, %v313, 0
        %v404 = vsel %vm324, %v314, 0
        %v407 = vsel %vm324, %v315, 0
        %v410 = vsel %vm324, %v316, 0
        %v413 = vsel %vm324, %v317, 0
        %v416 = vsel %vm324, %v318, 0
        %v419 = vsel %vm324, %v319, 0
        %421 = vmatprep.subr.mxu0 0.0
        %422 = vmatpush1.msra.mxu0 %v320
        %423 = vmatprep.subr.mxu0 0.0
        %424 = vmatpush1.msra.mxu0 %v321
        %425 = vmatprep.subr.mxu0 0.0
        %426 = vmatpush1.msra.mxu0 %v322
        %427 = vmatprep.subr.mxu0 0.0
        %428 = vmatpush1.msra.mxu0 %v323
        %429 = vmatprep.subr.mxu0 0.0
        %430 = vmatpush1.msra.mxu0 0.0
        %431 = vmatprep.subr.mxu0 0.0
        %432 = vmatpush1.msra.mxu0 0.0
        %433 = vmatprep.subr.mxu0 0.0
        %434 = vmatpush1.msra.mxu0 0.0
        %435 = vmatprep.subr.mxu0 0.0
        %436 = vmatpush1.msra.mxu0 0.0
        %437 = vmatprep.subr.mxu0 0.0
        %438 = vmatpush1.msra.mxu0 0.0
        %439 = vmatprep.subr.mxu0 0.0
        %440 = vmatpush1.msra.mxu0 0.0
        %441 = vmatprep.subr.mxu0 0.0
        %442 = vmatpush1.msra.mxu0 0.0
        %443 = vmatprep.subr.mxu0 0.0
        %444 = vmatpush1.msra.mxu0 0.0
        %445 = vmatprep.subr.mxu0 0.0
        %446 = vmatpush1.msra.mxu0 0.0
        %447 = vmatprep.subr.mxu0 0.0
        %448 = vmatpush1.msra.mxu0 0.0
        %449 = vmatprep.subr.mxu0 0.0
        %450 = vmatpush1.msra.mxu0 0.0
        %451 = vmatprep.subr.mxu0 0.0
        %452 = vmatpush1.msra.mxu0 0.0
        %453 = vmatprep.subr.mxu0 0.0
        %454 = vmatpush1.msra.mxu0 0.0
        %455 = vmatprep.subr.mxu0 0.0
        %456 = vmatpush1.msra.mxu0 0.0
        %457 = vmatprep.subr.mxu0 0.0
        %458 = vmatpush1.msra.mxu0 0.0
        %459 = vmatprep.subr.mxu0 0.0
        %460 = vmatpush1.msra.mxu0 0.0
        %461 = vmatprep.subr.mxu0 0.0
        %462 = vmatpush1.msra.mxu0 0.0
        %463 = vmatprep.subr.mxu0 0.0
        %464 = vmatpush1.msra.mxu0 0.0
        %465 = vmatprep.subr.mxu0 0.0
        %466 = vmatpush1.msra.mxu0 0.0
        %467 = vmatprep.subr.mxu0 0.0
        %468 = vmatpush1.msra.mxu0 0.0
        %469 = vmatprep.subr.mxu0 0.0
        %470 = vmatpush1.msra.mxu0 0.0
        %471 = vmatprep.subr.mxu0 0.0
        %472 = vmatpush1.msra.mxu0 0.0
        %473 = vmatprep.subr.mxu0 0.0
        %474 = vmatpush1.msra.mxu0 0.0
        %475 = vmatprep.subr.mxu0 0.0
        %476 = vmatpush1.msra.mxu0 0.0
        %477 = vmatprep.subr.mxu0 0.0
        %478 = vmatpush1.msra.mxu0 0.0
        %479 = vmatprep.subr.mxu0 0.0
        %480 = vmatpush1.msra.mxu0 0.0
        %481 = vmatprep.subr.mxu0 0.0
        %482 = vmatpush1.msra.mxu0 0.0
        %483 = vmatprep.subr.mxu0 0.0
        %484 = vmatpush1.msra.mxu0 0.0
        %485 = vmatprep.mubr.f32.mxu0 0.0
        %486 = vmatmul.mubr.f32.gmra.mrb[0].mxu0 %v326
        %v487 = vpop.f32.mrb[0].mxu0
        %v488 = vadd.f32 0.0, %v487
        %v489 = vpop.f32.mrb[0].mxu0
        %490 = vmatprep.mubr.f32.mxu0 0.0
        %491 = vmatmul.mubr.f32.gmra.mrb[0].mxu0 %v329
        %v492 = vpop.f32.mrb[0].mxu0
        %v493 = vadd.f32 0.0, %v492
        %v494 = vpop.f32.mrb[0].mxu0
        %495 = vmatprep.mubr.f32.mxu0 0.0
        %496 = vmatmul.mubr.f32.gmra.mrb[0].mxu0 %v332
        %v497 = vpop.f32.mrb[0].mxu0
        %v498 = vadd.f32 0.0, %v497
        %v499 = vpop.f32.mrb[0].mxu0
        %500 = vmatprep.mubr.f32.mxu0 0.0
        %501 = vmatmul.mubr.f32.gmra.mrb[0].mxu0 %v335
        %v502 = vpop.f32.mrb[0].mxu0
        %v503 = vadd.f32 0.0, %v502
        %v504 = vpop.f32.mrb[0].mxu0
        %505 = vmatprep.mubr.f32.mxu0 0.0
        %506 = vmatmul.mubr.f32.gmra.mrb[0].mxu0 %v338
        %v507 = vpop.f32.mrb[0].mxu0
        %v508 = vadd.f32 0.0, %v507
        %v509 = vpop.f32.mrb[0].mxu0
        %510 = vmatprep.mubr.f32.mxu0 0.0
        %511 = vmatmul.mubr.f32.gmra.mrb[0].mxu0 %v341
        %v512 = vpop.f32.mrb[0].mxu0
        %v513 = vadd.f32 0.0, %v512
        %v514 = vpop.f32.mrb[0].mxu0
        %515 = vmatprep.mubr.f32.mxu0 0.0
        %516 = vmatmul.mubr.f32.gmra.mrb[0].mxu0 %v344
        %v517 = vpop.f32.mrb[0].mxu0
        %v518 = vadd.f32 0.0, %v517
        %v519 = vpop.f32.mrb[0].mxu0
        %520 = vmatprep.mubr.f32.mxu0 0.0
        %521 = vmatmul.mubr.f32.gmra.mrb[0].mxu0 %v347
        %v522 = vpop.f32.mrb[0].mxu0
        %v523 = vadd.f32 0.0, %v522
        %v524 = vpop.f32.mrb[0].mxu0
        %525 = vmatprep.mubr.f32.mxu0 0.0
        %526 = vmatmul.mubr.f32.gmra.mrb[0].mxu0 %v350
        %v527 = vpop.f32.mrb[0].mxu0
        %v528 = vadd.f32 0.0, %v527
        %v529 = vpop.f32.mrb[0].mxu0
        %530 = vmatprep.mubr.f32.mxu0 0.0
        %531 = vmatmul.mubr.f32.gmra.mrb[0].mxu0 %v353
        %v532 = vpop.f32.mrb[0].mxu0
        %v533 = vadd.f32 0.0, %v532
        %v534 = vpop.f32.mrb[0].mxu0
        %535 = vmatprep.mubr.f32.mxu0 0.0
        %536 = vmatmul.mubr.f32.gmra.mrb[0].mxu0 %v356
        %v537 = vpop.f32.mrb[0].mxu0
        %v538 = vadd.f32 0.0, %v537
        %v539 = vpop.f32.mrb[0].mxu0
        %540 = vmatprep.mubr.f32.mxu0 0.0
        %541 = vmatmul.mubr.f32.gmra.mrb[0].mxu0 %v359
        %v542 = vpop.f32.mrb[0].mxu0
        %v543 = vadd.f32 0.0, %v542
        %v544 = vpop.f32.mrb[0].mxu0
        %545 = vmatprep.mubr.f32.mxu0 0.0
        %546 = vmatmul.mubr.f32.gmra.mrb[0].mxu0 %v362
        %v547 = vpop.f32.mrb[0].mxu0
        %v548 = vadd.f32 0.0, %v547
        %v549 = vpop.f32.mrb[0].mxu0
        %550 = vmatprep.mubr.f32.mxu0 0.0
        %551 = vmatmul.mubr.f32.gmra.mrb[0].mxu0 %v365
        %v552 = vpop.f32.mrb[0].mxu0
        %v553 = vadd.f32 0.0, %v552
        %v554 = vpop.f32.mrb[0].mxu0
        %555 = vmatprep.mubr.f32.mxu0 0.0
        %556 = vmatmul.mubr.f32.gmra.mrb[0].mxu0 %v368
        %v557 = vpop.f32.mrb[0].mxu0
        %v558 = vadd.f32 0.0, %v557
        %v559 = vpop.f32.mrb[0].mxu0
        %560 = vmatprep.mubr.f32.mxu0 0.0
        %561 = vmatmul.mubr.f32.gmra.mrb[0].mxu0 %v371
        %v562 = vpop.f32.mrb[0].mxu0
        %v563 = vadd.f32 0.0, %v562
        %v564 = vpop.f32.mrb[0].mxu0
        %565 = vmatprep.mubr.f32.mxu0 0.0
        %566 = vmatmul.mubr.f32.gmra.mrb[0].mxu0 %v374
        %v567 = vpop.f32.mrb[0].mxu0
        %v568 = vadd.f32 0.0, %v567
        %v569 = vpop.f32.mrb[0].mxu0
        %570 = vmatprep.mubr.f32.mxu0 0.0
        %571 = vmatmul.mubr.f32.gmra.mrb[0].mxu0 %v377
        %v572 = vpop.f32.mrb[0].mxu0
        %v573 = vadd.f32 0.0, %v572
        %v574 = vpop.f32.mrb[0].mxu0
        %575 = vmatprep.mubr.f32.mxu0 0.0
        %576 = vmatmul.mubr.f32.gmra.mrb[0].mxu0 %v380
        %v577 = vpop.f32.mrb[0].mxu0
        %v578 = vadd.f32 0.0, %v577
        %v579 = vpop.f32.mrb[0].mxu0
        %580 = vmatprep.mubr.f32.mxu0 0.0
        %581 = vmatmul.mubr.f32.gmra.mrb[0].mxu0 %v383
        %v582 = vpop.f32.mrb[0].mxu0
        %v583 = vadd.f32 0.0, %v582
        %v584 = vpop.f32.mrb[0].mxu0
        %585 = vmatprep.mubr.f32.mxu0 0.0
        %586 = vmatmul.mubr.f32.gmra.mrb[0].mxu0 %v386
        %v587 = vpop.f32.mrb[0].mxu0
        %v588 = vadd.f32 0.0, %v587
        %v589 = vpop.f32.mrb[0].mxu0
        %590 = vmatprep.mubr.f32.mxu0 0.0
        %591 = vmatmul.mubr.f32.gmra.mrb[0].mxu0 %v389
        %v592 = vpop.f32.mrb[0].mxu0
        %v593 = vadd.f32 0.0, %v592
        %v594 = vpop.f32.mrb[0].mxu0
        %595 = vmatprep.mubr.f32.mxu0 0.0
        %596 = vmatmul.mubr.f32.gmra.mrb[0].mxu0 %v392
        %v597 = vpop.f32.mrb[0].mxu0
        %v598 = vadd.f32 0.0, %v597
        %v599 = vpop.f32.mrb[0].mxu0
        %600 = vmatprep.mubr.f32.mxu0 0.0
        %601 = vmatmul.mubr.f32.gmra.mrb[0].mxu0 %v395
        %v602 = vpop.f32.mrb[0].mxu0
        %v603 = vadd.f32 0.0, %v602
        %v604 = vpop.f32.mrb[0].mxu0
        %605 = vmatprep.mubr.f32.mxu0 0.0
        %606 = vmatmul.mubr.f32.gmra.mrb[0].mxu0 %v398
        %v607 = vpop.f32.mrb[0].mxu0
        %v608 = vadd.f32 0.0, %v607
        %v609 = vpop.f32.mrb[0].mxu0
        %610 = vmatprep.mubr.f32.mxu0 0.0
        %611 = vmatmul.mubr.f32.gmra.mrb[0].mxu0 %v401
        %v612 = vpop.f32.mrb[0].mxu0
        %v613 = vadd.f32 0.0, %v612
        %v614 = vpop.f32.mrb[0].mxu0
        %615 = vmatprep.mubr.f32.mxu0 0.0
        %616 = vmatmul.mubr.f32.gmra.mrb[0].mxu0 %v404
        %v617 = vpop.f32.mrb[0].mxu0
        %v618 = vadd.f32 0.0, %v617
        %v619 = vpop.f32.mrb[0].mxu0
        %620 = vmatprep.mubr.f32.mxu0 0.0
        %621 = vmatmul.mubr.f32.gmra.mrb[0].mxu0 %v407
        %v622 = vpop.f32.mrb[0].mxu0
        %v623 = vadd.f32 0.0, %v622
        %v624 = vpop.f32.mrb[0].mxu0
        %625 = vmatprep.mubr.f32.mxu0 0.0
        %626 = vmatmul.mubr.f32.gmra.mrb[0].mxu0 %v410
        %v627 = vpop.f32.mrb[0].mxu0
        %v628 = vadd.f32 0.0, %v627
        %v629 = vpop.f32.mrb[0].mxu0
        %630 = vmatprep.mubr.f32.mxu0 0.0
        %631 = vmatmul.mubr.f32.gmra.mrb[0].mxu0 %v413
        %v632 = vpop.f32.mrb[0].mxu0
        %v633 = vadd.f32 0.0, %v632
        %v634 = vpop.f32.mrb[0].mxu0
        %635 = vmatprep.mubr.f32.mxu0 0.0
        %636 = vmatmul.mubr.f32.gmra.mrb[0].mxu0 %v416
        %v637 = vpop.f32.mrb[0].mxu0
        %v638 = vadd.f32 0.0, %v637
        %v639 = vpop.f32.mrb[0].mxu0
        %640 = vmatprep.mubr.f32.mxu0 0.0
        %641 = vmatmul.mubr.f32.gmra.mrb[0].mxu0 %v419
        %v642 = vpop.f32.mrb[0].mxu0
        %v643 = vadd.f32 0.0, %v642
        %v644 = vpop.f32.mrb[0].mxu0
        %645 = vdwg.mxu0
        %v646 = vld [vmem:[#allocation2] sm:$0xff]
        %v647 = vld [vmem:[#allocation2 + $0x8] sm:$0xff]
        %v648 = vld [vmem:[#allocation2 + $0x10] sm:$0xff]
        %v649 = vld [vmem:[#allocation2 + $0x18] sm:$0xff]
        %v650 = vld [vmem:[#allocation2 + $0x20] sm:$0xff]
        %v651 = vld [vmem:[#allocation2 + $0x28] sm:$0xff]
        %v652 = vld [vmem:[#allocation2 + $0x30] sm:$0xff]
        %v653 = vld [vmem:[#allocation2 + $0x38] sm:$0xff]
        %v654 = vld [vmem:[#allocation2 + $0x40] sm:$0xff]
        %v655 = vld [vmem:[#allocation2 + $0x48] sm:$0xff]
        %v656 = vld [vmem:[#allocation2 + $0x50] sm:$0xff]
        %v657 = vld [vmem:[#allocation2 + $0x58] sm:$0xff]
        %v658 = vld [vmem:[#allocation2 + $0x60] sm:$0xff]
        %v659 = vld [vmem:[#allocation2 + $0x68] sm:$0xff]
        %v660 = vld [vmem:[#allocation2 + $0x70] sm:$0xff]
        %v661 = vld [vmem:[#allocation2 + $0x78] sm:$0xff]
        %v662 = vld [vmem:[%s257] sm:$0xff]
        %v663 = vld [vmem:[%s257 + $0x8] sm:$0xff]
        %v664 = vld [vmem:[%s257 + $0x10] sm:$0xff]
        %v665 = vld [vmem:[%s257 + $0x18] sm:$0xff]
        %v666 = vld [vmem:[%s257 + $0x20] sm:$0xff]
        %v667 = vld [vmem:[%s257 + $0x28] sm:$0xff]
        %v668 = vld [vmem:[%s257 + $0x30] sm:$0xff]
        %v669 = vld [vmem:[%s257 + $0x38] sm:$0xff]
        %v670 = vld [vmem:[%s257 + $0x40] sm:$0xff]
        %v671 = vld [vmem:[%s257 + $0x48] sm:$0xff]
        %v672 = vld [vmem:[%s257 + $0x50] sm:$0xff]
        %v673 = vld [vmem:[%s257 + $0x58] sm:$0xff]
        %v674 = vld [vmem:[%s257 + $0x60] sm:$0xff]
        %v675 = vld [vmem:[%s257 + $0x68] sm:$0xff]
        %v676 = vld [vmem:[%s257 + $0x70] sm:$0xff]
        %v677 = vld [vmem:[%s257 + $0x78] sm:$0xff]
        %v678 = vpack.c.bf16 %v493, %v488
        %v679 = vpack.c.bf16 %v503, %v498
        %v680 = vpack.c.bf16 %v513, %v508
        %v681 = vpack.c.bf16 %v523, %v518
        %v682 = vpack.c.bf16 %v533, %v528
        %v683 = vpack.c.bf16 %v543, %v538
        %v684 = vpack.c.bf16 %v553, %v548
        %v685 = vpack.c.bf16 %v563, %v558
        %v686 = vpack.c.bf16 %v573, %v568
        %v687 = vpack.c.bf16 %v583, %v578
        %v688 = vpack.c.bf16 %v593, %v588
        %v689 = vpack.c.bf16 %v603, %v598
        %v690 = vpack.c.bf16 %v613, %v608
        %v691 = vpack.c.bf16 %v623, %v618
        %v692 = vpack.c.bf16 %v633, %v628
        %v693 = vpack.c.bf16 %v643, %v638
        %v710 = vunpack.c.l.b16 %v662
        %v711 = vunpack.c.h.b16 %v662
        %v712 = vunpack.c.l.b16 %v663
        %v713 = vunpack.c.h.b16 %v663
        %v714 = vunpack.c.l.b16 %v664
        %v715 = vunpack.c.h.b16 %v664
        %v716 = vunpack.c.l.b16 %v665
        %v717 = vunpack.c.h.b16 %v665
        %v718 = vunpack.c.l.b16 %v666
        %v719 = vunpack.c.h.b16 %v666
        %v720 = vunpack.c.l.b16 %v667
        %v721 = vunpack.c.h.b16 %v667
        %v722 = vunpack.c.l.b16 %v668
        %v723 = vunpack.c.h.b16 %v668
        %v724 = vunpack.c.l.b16 %v669
        %v725 = vunpack.c.h.b16 %v669
        %v726 = vunpack.c.l.b16 %v670
        %v727 = vunpack.c.h.b16 %v670
        %v728 = vunpack.c.l.b16 %v671
        %v729 = vunpack.c.h.b16 %v671
        %v730 = vunpack.c.l.b16 %v672
        %v731 = vunpack.c.h.b16 %v672
        %v732 = vunpack.c.l.b16 %v673
        %v733 = vunpack.c.h.b16 %v673
        %v734 = vunpack.c.l.b16 %v674
        %v735 = vunpack.c.h.b16 %v674
        %v736 = vunpack.c.l.b16 %v675
        %v737 = vunpack.c.h.b16 %v675
        %v738 = vunpack.c.l.b16 %v676
        %v739 = vunpack.c.h.b16 %v676
        %v740 = vunpack.c.l.b16 %v677
        %v741 = vunpack.c.h.b16 %v677
        %v742 = vpack.c.b16 %v712, %v710
        %v743 = vpack.c.b16 %v713, %v711
        %v744 = vpack.c.b16 %v716, %v714
        %v745 = vpack.c.b16 %v717, %v715
        %v746 = vpack.c.b16 %v720, %v718
        %v747 = vpack.c.b16 %v721, %v719
        %v748 = vpack.c.b16 %v724, %v722
        %v749 = vpack.c.b16 %v725, %v723
        %v750 = vpack.c.b16 %v728, %v726
        %v751 = vpack.c.b16 %v729, %v727
        %v752 = vpack.c.b16 %v732, %v730
        %v753 = vpack.c.b16 %v733, %v731
        %v754 = vpack.c.b16 %v736, %v734
        %v755 = vpack.c.b16 %v737, %v735
        %v756 = vpack.c.b16 %v740, %v738
        %v757 = vpack.c.b16 %v741, %v739
        %774 = vmatprep.subr.bf16.mxu0 0
        %775 = vmatpush1.bf16.msra.mxu0 %v678
        %776 = vmatprep.subr.bf16.mxu0 0
        %777 = vmatpush1.bf16.msra.mxu0 %v679
        %778 = vmatprep.subr.bf16.mxu0 0
        %779 = vmatpush1.bf16.msra.mxu0 %v680
        %780 = vmatprep.subr.bf16.mxu0 0
        %781 = vmatpush1.bf16.msra.mxu0 %v681
        %782 = vmatprep.subr.bf16.mxu0 0
        %783 = vmatpush1.bf16.msra.mxu0 %v682
        %784 = vmatprep.subr.bf16.mxu0 0
        %785 = vmatpush1.bf16.msra.mxu0 %v683
        %786 = vmatprep.subr.bf16.mxu0 0
        %787 = vmatpush1.bf16.msra.mxu0 %v684
        %788 = vmatprep.subr.bf16.mxu0 0
        %789 = vmatpush1.bf16.msra.mxu0 %v685
        %790 = vmatprep.subr.bf16.mxu0 0
        %791 = vmatpush1.bf16.msra.mxu0 %v686
        %792 = vmatprep.subr.bf16.mxu0 0
        %793 = vmatpush1.bf16.msra.mxu0 %v687
        %794 = vmatprep.subr.bf16.mxu0 0
        %795 = vmatpush1.bf16.msra.mxu0 %v688
        %796 = vmatprep.subr.bf16.mxu0 0
        %797 = vmatpush1.bf16.msra.mxu0 %v689
        %798 = vmatprep.subr.bf16.mxu0 0
        %799 = vmatpush1.bf16.msra.mxu0 %v690
        %800 = vmatprep.subr.bf16.mxu0 0
        %801 = vmatpush1.bf16.msra.mxu0 %v691
        %802 = vmatprep.subr.bf16.mxu0 0
        %803 = vmatpush1.bf16.msra.mxu0 %v692
        %804 = vmatprep.subr.bf16.mxu0 0
        %805 = vmatpush1.bf16.msra.mxu0 %v693
        %806 = vmatprep.mubr.bf16.mxu0 %v743
        %807 = vmatmul.mubr.bf16.gmra.mrb[0].mxu0 %v742
        %v808 = vpop.f32.mrb[0].mxu0
        %v809 = vadd.f32 0.0, %v808
        %v810 = vpop.f32.mrb[0].mxu0
        %v811 = vpop.f32.mrb[0].mxu0
        %v812 = vadd.f32 0.0, %v811
        %v813 = vpop.f32.mrb[0].mxu0
        %814 = vmatprep.mubr.bf16.mxu0 %v745
        %815 = vmatmul.mubr.bf16.gmra.mrb[0].mxu0 %v744
        %v816 = vpop.f32.mrb[0].mxu0
        %v817 = vadd.f32 0.0, %v816
        %v818 = vpop.f32.mrb[0].mxu0
        %v819 = vpop.f32.mrb[0].mxu0
        %v820 = vadd.f32 0.0, %v819
        %v821 = vpop.f32.mrb[0].mxu0
        %822 = vmatprep.mubr.bf16.mxu0 %v747
        %823 = vmatmul.mubr.bf16.gmra.mrb[0].mxu0 %v746
        %v824 = vpop.f32.mrb[0].mxu0
        %v825 = vadd.f32 0.0, %v824
        %v826 = vpop.f32.mrb[0].mxu0
        %v827 = vpop.f32.mrb[0].mxu0
        %v828 = vadd.f32 0.0, %v827
        %v829 = vpop.f32.mrb[0].mxu0
        %830 = vmatprep.mubr.bf16.mxu0 %v749
        %831 = vmatmul.mubr.bf16.gmra.mrb[0].mxu0 %v748
        %v832 = vpop.f32.mrb[0].mxu0
        %v833 = vadd.f32 0.0, %v832
        %v834 = vpop.f32.mrb[0].mxu0
        %v835 = vpop.f32.mrb[0].mxu0
        %v836 = vadd.f32 0.0, %v835
        %v837 = vpop.f32.mrb[0].mxu0
        %838 = vmatprep.mubr.bf16.mxu0 %v751
        %839 = vmatmul.mubr.bf16.gmra.mrb[0].mxu0 %v750
        %v840 = vpop.f32.mrb[0].mxu0
        %v841 = vadd.f32 0.0, %v840
        %v842 = vpop.f32.mrb[0].mxu0
        %v843 = vpop.f32.mrb[0].mxu0
        %v844 = vadd.f32 0.0, %v843
        %v845 = vpop.f32.mrb[0].mxu0
        %846 = vmatprep.mubr.bf16.mxu0 %v753
        %847 = vmatmul.mubr.bf16.gmra.mrb[0].mxu0 %v752
        %v848 = vpop.f32.mrb[0].mxu0
        %v849 = vadd.f32 0.0, %v848
        %v850 = vpop.f32.mrb[0].mxu0
        %v851 = vpop.f32.mrb[0].mxu0
        %v852 = vadd.f32 0.0, %v851
        %v853 = vpop.f32.mrb[0].mxu0
        %854 = vmatprep.mubr.bf16.mxu0 %v755
        %855 = vmatmul.mubr.bf16.gmra.mrb[0].mxu0 %v754
        %v856 = vpop.f32.mrb[0].mxu0
        %v857 = vadd.f32 0.0, %v856
        %v858 = vpop.f32.mrb[0].mxu0
        %v859 = vpop.f32.mrb[0].mxu0
        %v860 = vadd.f32 0.0, %v859
        %v861 = vpop.f32.mrb[0].mxu0
        %862 = vmatprep.mubr.bf16.mxu0 %v757
        %863 = vmatmul.mubr.bf16.gmra.mrb[0].mxu0 %v756
        %v864 = vpop.f32.mrb[0].mxu0
        %v865 = vadd.f32 0.0, %v864
        %v866 = vpop.f32.mrb[0].mxu0
        %v867 = vpop.f32.mrb[0].mxu0
        %v868 = vadd.f32 0.0, %v867
        %v869 = vpop.f32.mrb[0].mxu0
        %870 = vdwg.mxu0
        %v871 = vadd.f32 %v646, %v809
        %v872 = vadd.f32 %v647, %v812
        %v873 = vadd.f32 %v648, %v817
        %v874 = vadd.f32 %v649, %v820
        %v875 = vadd.f32 %v650, %v825
        %v876 = vadd.f32 %v651, %v828
        %v877 = vadd.f32 %v652, %v833
        %v878 = vadd.f32 %v653, %v836
        %v879 = vadd.f32 %v654, %v841
        %v880 = vadd.f32 %v655, %v844
        %v881 = vadd.f32 %v656, %v849
        %v882 = vadd.f32 %v657, %v852
        %v883 = vadd.f32 %v658, %v857
        %v884 = vadd.f32 %v659, %v860
        %v885 = vadd.f32 %v660, %v865
        %v886 = vadd.f32 %v661, %v868
        %887 = vst [vmem:[#allocation2] sm:$0xff] %v871
        %888 = vst [vmem:[#allocation2 + $0x8] sm:$0xff] %v872
        %889 = vst [vmem:[#allocation2 + $0x10] sm:$0xff] %v873
        %890 = vst [vmem:[#allocation2 + $0x18] sm:$0xff] %v874
        %891 = vst [vmem:[#allocation2 + $0x20] sm:$0xff] %v875
        %892 = vst [vmem:[#allocation2 + $0x28] sm:$0xff] %v876
        %893 = vst [vmem:[#allocation2 + $0x30] sm:$0xff] %v877
        %894 = vst [vmem:[#allocation2 + $0x38] sm:$0xff] %v878
        %895 = vst [vmem:[#allocation2 + $0x40] sm:$0xff] %v879
        %896 = vst [vmem:[#allocation2 + $0x48] sm:$0xff] %v880
        %897 = vst [vmem:[#allocation2 + $0x50] sm:$0xff] %v881
        %898 = vst [vmem:[#allocation2 + $0x58] sm:$0xff] %v882
        %899 = vst [vmem:[#allocation2 + $0x60] sm:$0xff] %v883
        %900 = vst [vmem:[#allocation2 + $0x68] sm:$0xff] %v884
        %901 = vst [vmem:[#allocation2 + $0x70] sm:$0xff] %v885
        %902 = vst [vmem:[#allocation2 + $0x78] sm:$0xff] %v886
        // Predicated region
        $region45: #{tpu_custom_call.1} parent=35 // pred_check
          %p903 = pneg %p268
        $region46: #{tpu_custom_call.1} parent=35 // pred_check_branch
          %905 = sbr.rel (%p903) target = $region48
        $region47: #{tpu_custom_call.1} parent=35 // pred_region
          %v906 = vld [vmem:[#allocation2] sm:$0xff]
          %v907 = vld [vmem:[#allocation2 + $0x8] sm:$0xff]
          %v908 = vld [vmem:[#allocation2 + $0x10] sm:$0xff]
          %v909 = vld [vmem:[#allocation2 + $0x18] sm:$0xff]
          %v910 = vld [vmem:[#allocation2 + $0x20] sm:$0xff]
          %v911 = vld [vmem:[#allocation2 + $0x28] sm:$0xff]
          %v912 = vld [vmem:[#allocation2 + $0x30] sm:$0xff]
          %v913 = vld [vmem:[#allocation2 + $0x38] sm:$0xff]
          %v914 = vld [vmem:[#allocation2 + $0x40] sm:$0xff]
          %v915 = vld [vmem:[#allocation2 + $0x48] sm:$0xff]
          %v916 = vld [vmem:[#allocation2 + $0x50] sm:$0xff]
          %v917 = vld [vmem:[#allocation2 + $0x58] sm:$0xff]
          %v918 = vld [vmem:[#allocation2 + $0x60] sm:$0xff]
          %v919 = vld [vmem:[#allocation2 + $0x68] sm:$0xff]
          %v920 = vld [vmem:[#allocation2 + $0x70] sm:$0xff]
          %v921 = vld [vmem:[#allocation2 + $0x78] sm:$0xff]
          %v922 = vmax.f32 %v906, 0.0
          %v923 = vmax.f32 %v907, 0.0
          %v924 = vmax.f32 %v908, 0.0
          %v925 = vmax.f32 %v909, 0.0
          %v926 = vmax.f32 %v910, 0.0
          %v927 = vmax.f32 %v911, 0.0
          %v928 = vmax.f32 %v912, 0.0
          %v929 = vmax.f32 %v913, 0.0
          %v930 = vmax.f32 %v914, 0.0
          %v931 = vmax.f32 %v915, 0.0
          %v932 = vmax.f32 %v916, 0.0
          %v933 = vmax.f32 %v917, 0.0
          %v934 = vmax.f32 %v918, 0.0
          %v935 = vmax.f32 %v919, 0.0
          %v936 = vmax.f32 %v920, 0.0
          %v937 = vmax.f32 %v921, 0.0
          %v938 = vld [vmem:[#allocation3] sm:$0xff]
          %v939 = vld [vmem:[#allocation3 + $0x8] sm:$0xff]
          %v940 = vld [vmem:[#allocation3 + $0x10] sm:$0xff]
          %v941 = vld [vmem:[#allocation3 + $0x18] sm:$0xff]
          %v942 = vld [vmem:[#allocation3 + $0x20] sm:$0xff]
          %v943 = vld [vmem:[#allocation3 + $0x28] sm:$0xff]
          %v944 = vld [vmem:[#allocation3 + $0x30] sm:$0xff]
          %v945 = vld [vmem:[#allocation3 + $0x38] sm:$0xff]
          %v946 = vld [vmem:[#allocation3 + $0x40] sm:$0xff]
          %v947 = vld [vmem:[#allocation3 + $0x48] sm:$0xff]
          %v948 = vld [vmem:[#allocation3 + $0x50] sm:$0xff]
          %v949 = vld [vmem:[#allocation3 + $0x58] sm:$0xff]
          %v950 = vld [vmem:[#allocation3 + $0x60] sm:$0xff]
          %v951 = vld [vmem:[#allocation3 + $0x68] sm:$0xff]
          %v952 = vld [vmem:[#allocation3 + $0x70] sm:$0xff]
          %v953 = vld [vmem:[#allocation3 + $0x78] sm:$0xff]
          %954 = vmatprep.subr.mxu0 0.0
          %955 = vmatpush1.msra.mxu0 %v938
          %956 = vmatprep.subr.mxu0 0.0
          %957 = vmatpush1.msra.mxu0 %v939
          %958 = vmatprep.subr.mxu0 0.0
          %959 = vmatpush1.msra.mxu0 %v940
          %960 = vmatprep.subr.mxu0 0.0
          %961 = vmatpush1.msra.mxu0 %v941
          %962 = vmatprep.subr.mxu0 0.0
          %963 = vmatpush1.msra.mxu0 %v942
          %964 = vmatprep.subr.mxu0 0.0
          %965 = vmatpush1.msra.mxu0 %v943
          %966 = vmatprep.subr.mxu0 0.0
          %967 = vmatpush1.msra.mxu0 %v944
          %968 = vmatprep.subr.mxu0 0.0
          %969 = vmatpush1.msra.mxu0 %v945
          %970 = vmatprep.subr.mxu0 0.0
          %971 = vmatpush1.msra.mxu0 %v946
          %972 = vmatprep.subr.mxu0 0.0
          %973 = vmatpush1.msra.mxu0 %v947
          %974 = vmatprep.subr.mxu0 0.0
          %975 = vmatpush1.msra.mxu0 %v948
          %976 = vmatprep.subr.mxu0 0.0
          %977 = vmatpush1.msra.mxu0 %v949
          %978 = vmatprep.subr.mxu0 0.0
          %979 = vmatpush1.msra.mxu0 %v950
          %980 = vmatprep.subr.mxu0 0.0
          %981 = vmatpush1.msra.mxu0 %v951
          %982 = vmatprep.subr.mxu0 0.0
          %983 = vmatpush1.msra.mxu0 %v952
          %984 = vmatprep.subr.mxu0 0.0
          %985 = vmatpush1.msra.mxu0 %v953
          %986 = vmatprep.subr.mxu0 0.0
          %987 = vmatpush1.msra.mxu0 0.0
          %988 = vmatprep.subr.mxu0 0.0
          %989 = vmatpush1.msra.mxu0 0.0
          %990 = vmatprep.subr.mxu0 0.0
          %991 = vmatpush1.msra.mxu0 0.0
          %992 = vmatprep.subr.mxu0 0.0
          %993 = vmatpush1.msra.mxu0 0.0
          %994 = vmatprep.subr.mxu0 0.0
          %995 = vmatpush1.msra.mxu0 0.0
          %996 = vmatprep.subr.mxu0 0.0
          %997 = vmatpush1.msra.mxu0 0.0
          %998 = vmatprep.subr.mxu0 0.0
          %999 = vmatpush1.msra.mxu0 0.0
          %1000 = vmatprep.subr.mxu0 0.0
          %1001 = vmatpush1.msra.mxu0 0.0
          %1002 = vmatprep.subr.mxu0 0.0
          %1003 = vmatpush1.msra.mxu0 0.0
          %1004 = vmatprep.subr.mxu0 0.0
          %1005 = vmatpush1.msra.mxu0 0.0
          %1006 = vmatprep.subr.mxu0 0.0
          %1007 = vmatpush1.msra.mxu0 0.0
          %1008 = vmatprep.subr.mxu0 0.0
          %1009 = vmatpush1.msra.mxu0 0.0
          %1010 = vmatprep.subr.mxu0 0.0
          %1011 = vmatpush1.msra.mxu0 0.0
          %1012 = vmatprep.subr.mxu0 0.0
          %1013 = vmatpush1.msra.mxu0 0.0
          %1014 = vmatprep.subr.mxu0 0.0
          %1015 = vmatpush1.msra.mxu0 0.0
          %1016 = vmatprep.subr.mxu0 0.0
          %1017 = vmatpush1.msra.mxu0 0.0
          %1018 = vmatprep.mubr.f32.mxu0 0.0
          %1019 = vmatmul.mubr.f32.gmra.mrb[0].mxu0 %v922
          %v1020 = vpop.f32.mrb[0].mxu0
          %v1021 = vadd.f32 0.0, %v1020
          %v1022 = vpop.f32.mrb[0].mxu0
          %1023 = vmatprep.mubr.f32.mxu0 0.0
          %1024 = vmatmul.mubr.f32.gmra.mrb[0].mxu0 %v923
          %v1025 = vpop.f32.mrb[0].mxu0
          %v1026 = vadd.f32 0.0, %v1025
          %v1027 = vpop.f32.mrb[0].mxu0
          %1028 = vmatprep.mubr.f32.mxu0 0.0
          %1029 = vmatmul.mubr.f32.gmra.mrb[0].mxu0 %v924
          %v1030 = vpop.f32.mrb[0].mxu0
          %v1031 = vadd.f32 0.0, %v1030
          %v1032 = vpop.f32.mrb[0].mxu0
          %1033 = vmatprep.mubr.f32.mxu0 0.0
          %1034 = vmatmul.mubr.f32.gmra.mrb[0].mxu0 %v925
          %v1035 = vpop.f32.mrb[0].mxu0
          %v1036 = vadd.f32 0.0, %v1035
          %v1037 = vpop.f32.mrb[0].mxu0
          %1038 = vmatprep.mubr.f32.mxu0 0.0
          %1039 = vmatmul.mubr.f32.gmra.mrb[0].mxu0 %v926
          %v1040 = vpop.f32.mrb[0].mxu0
          %v1041 = vadd.f32 0.0, %v1040
          %v1042 = vpop.f32.mrb[0].mxu0
          %1043 = vmatprep.mubr.f32.mxu0 0.0
          %1044 = vmatmul.mubr.f32.gmra.mrb[0].mxu0 %v927
          %v1045 = vpop.f32.mrb[0].mxu0
          %v1046 = vadd.f32 0.0, %v1045
          %v1047 = vpop.f32.mrb[0].mxu0
          %1048 = vmatprep.mubr.f32.mxu0 0.0
          %1049 = vmatmul.mubr.f32.gmra.mrb[0].mxu0 %v928
          %v1050 = vpop.f32.mrb[0].mxu0
          %v1051 = vadd.f32 0.0, %v1050
          %v1052 = vpop.f32.mrb[0].mxu0
          %1053 = vmatprep.mubr.f32.mxu0 0.0
          %1054 = vmatmul.mubr.f32.gmra.mrb[0].mxu0 %v929
          %v1055 = vpop.f32.mrb[0].mxu0
          %v1056 = vadd.f32 0.0, %v1055
          %v1057 = vpop.f32.mrb[0].mxu0
          %1058 = vmatprep.mubr.f32.mxu0 0.0
          %1059 = vmatmul.mubr.f32.gmra.mrb[0].mxu0 %v930
          %v1060 = vpop.f32.mrb[0].mxu0
          %v1061 = vadd.f32 0.0, %v1060
          %v1062 = vpop.f32.mrb[0].mxu0
          %1063 = vmatprep.mubr.f32.mxu0 0.0
          %1064 = vmatmul.mubr.f32.gmra.mrb[0].mxu0 %v931
          %v1065 = vpop.f32.mrb[0].mxu0
          %v1066 = vadd.f32 0.0, %v1065
          %v1067 = vpop.f32.mrb[0].mxu0
          %1068 = vmatprep.mubr.f32.mxu0 0.0
          %1069 = vmatmul.mubr.f32.gmra.mrb[0].mxu0 %v932
          %v1070 = vpop.f32.mrb[0].mxu0
          %v1071 = vadd.f32 0.0, %v1070
          %v1072 = vpop.f32.mrb[0].mxu0
          %1073 = vmatprep.mubr.f32.mxu0 0.0
          %1074 = vmatmul.mubr.f32.gmra.mrb[0].mxu0 %v933
          %v1075 = vpop.f32.mrb[0].mxu0
          %v1076 = vadd.f32 0.0, %v1075
          %v1077 = vpop.f32.mrb[0].mxu0
          %1078 = vmatprep.mubr.f32.mxu0 0.0
          %1079 = vmatmul.mubr.f32.gmra.mrb[0].mxu0 %v934
          %v1080 = vpop.f32.mrb[0].mxu0
          %v1081 = vadd.f32 0.0, %v1080
          %v1082 = vpop.f32.mrb[0].mxu0
          %1083 = vmatprep.mubr.f32.mxu0 0.0
          %1084 = vmatmul.mubr.f32.gmra.mrb[0].mxu0 %v935
          %v1085 = vpop.f32.mrb[0].mxu0
          %v1086 = vadd.f32 0.0, %v1085
          %v1087 = vpop.f32.mrb[0].mxu0
          %1088 = vmatprep.mubr.f32.mxu0 0.0
          %1089 = vmatmul.mubr.f32.gmra.mrb[0].mxu0 %v936
          %v1090 = vpop.f32.mrb[0].mxu0
          %v1091 = vadd.f32 0.0, %v1090
          %v1092 = vpop.f32.mrb[0].mxu0
          %1093 = vmatprep.mubr.f32.mxu0 0.0
          %1094 = vmatmul.mubr.f32.gmra.mrb[0].mxu0 %v937
          %v1095 = vpop.f32.mrb[0].mxu0
          %v1096 = vadd.f32 0.0, %v1095
          %v1097 = vpop.f32.mrb[0].mxu0
          %1098 = vdwg.mxu0
          %v1099 = vpack.c.bf16 %v1026, %v1021
          %v1100 = vpack.c.bf16 %v1036, %v1031
          %v1101 = vpack.c.bf16 %v1046, %v1041
          %v1102 = vpack.c.bf16 %v1056, %v1051
          %v1103 = vpack.c.bf16 %v1066, %v1061
          %v1104 = vpack.c.bf16 %v1076, %v1071
          %v1105 = vpack.c.bf16 %v1086, %v1081
          %v1106 = vpack.c.bf16 %v1096, %v1091
          %v1115 = vunpack.c.l.b16 %v1099
          %v1116 = vunpack.c.h.b16 %v1099
          %v1117 = vunpack.c.l.b16 %v1100
          %v1118 = vunpack.c.h.b16 %v1100
          %v1119 = vunpack.c.l.b16 %v1101
          %v1120 = vunpack.c.h.b16 %v1101
          %v1121 = vunpack.c.l.b16 %v1102
          %v1122 = vunpack.c.h.b16 %v1102
          %v1123 = vunpack.c.l.b16 %v1103
          %v1124 = vunpack.c.h.b16 %v1103
          %v1125 = vunpack.c.l.b16 %v1104
          %v1126 = vunpack.c.h.b16 %v1104
          %v1127 = vunpack.c.l.b16 %v1105
          %v1128 = vunpack.c.h.b16 %v1105
          %v1129 = vunpack.c.l.b16 %v1106
          %v1130 = vunpack.c.h.b16 %v1106
          %v1131 = vpack.c.b16 %v1115, %v1115
          %v1132 = vpack.c.b16 %v1116, %v1116
          %v1133 = vpack.c.b16 %v1117, %v1117
          %v1134 = vpack.c.b16 %v1118, %v1118
          %v1135 = vpack.c.b16 %v1119, %v1119
          %v1136 = vpack.c.b16 %v1120, %v1120
          %v1137 = vpack.c.b16 %v1121, %v1121
          %v1138 = vpack.c.b16 %v1122, %v1122
          %v1139 = vpack.c.b16 %v1123, %v1123
          %v1140 = vpack.c.b16 %v1124, %v1124
          %v1141 = vpack.c.b16 %v1125, %v1125
          %v1142 = vpack.c.b16 %v1126, %v1126
          %v1143 = vpack.c.b16 %v1127, %v1127
          %v1144 = vpack.c.b16 %v1128, %v1128
          %v1145 = vpack.c.b16 %v1129, %v1129
          %v1146 = vpack.c.b16 %v1130, %v1130
          %1163 = vst [vmem:[%s247] sm:$0xf] %v1131
          %1164 = vst [vmem:[%s247 + $0x4] sm:$0xf] %v1132
          %1165 = vst [vmem:[%s247 + $0x8] sm:$0xf] %v1133
          %1166 = vst [vmem:[%s247 + $0xc] sm:$0xf] %v1134
          %1167 = vst [vmem:[%s247 + $0x10] sm:$0xf] %v1135
          %1168 = vst [vmem:[%s247 + $0x14] sm:$0xf] %v1136
          %1169 = vst [vmem:[%s247 + $0x18] sm:$0xf] %v1137
          %1170 = vst [vmem:[%s247 + $0x1c] sm:$0xf] %v1138
          %1171 = vst [vmem:[%s247 + $0x20] sm:$0xf] %v1139
          %1172 = vst [vmem:[%s247 + $0x24] sm:$0xf] %v1140
          %1173 = vst [vmem:[%s247 + $0x28] sm:$0xf] %v1141
          %1174 = vst [vmem:[%s247 + $0x2c] sm:$0xf] %v1142
          %1175 = vst [vmem:[%s247 + $0x30] sm:$0xf] %v1143
          %1176 = vst [vmem:[%s247 + $0x34] sm:$0xf] %v1144
          %1177 = vst [vmem:[%s247 + $0x38] sm:$0xf] %v1145
          %1178 = vst [vmem:[%s247 + $0x3c] sm:$0xf] %v1146
        $region48: #{tpu_custom_call.1} parent=35 // pred_fallthru
          _
        %s1179 = sand.u32 %s135, 1
        %s1180 = scalar_lea.sflag [#allocation5], %s1179
        %s1181 = sand.u32 %s135, 1
        %s1182 = smul.addr %s1181, 64
        %s1183 = scalar_lea.vmem [#allocation6], %s1182
        // Predicated region
        $region49: #{tpu_custom_call.1} parent=35 // pred_check
          %p1184 = pneg %p145
        $region50: #{tpu_custom_call.1} parent=35 // pred_check_branch
          %1186 = sbr.rel (%p1184) target = $region52
        $region51: #{tpu_custom_call.1} parent=35 // pred_region
          %s1187 = smul.u32 16, %s23
          %s1189 = ssub.s32 1024, 1024
          %1190 = vsyncadd %s1180, %s1189
          %s1191 = smul.addr %s1187, 64
          %s1192 = scalar_lea.hbm %s4, %s1191
          %s1193 = sshll.u32 %s1183, 4
          %s1194 = int_to_ptr.vmem [resolvable:$true] %s1193
          %1199 = dma.vmem_to_hbm [thread:$0]  %s1194, 1024, %s1192, %s1180, 64, 64, 4
        $region52: #{tpu_custom_call.1} parent=35 // pred_fallthru
          _
      $region36: #{tpu_custom_call.1} parent=5 // pred_fallthru
        _
      %p1200 = scmp.le.s32.totalorder 2, %s14
      // Predicated region
      $region53: #{tpu_custom_call.1} parent=5 // pred_check
        %p1201 = pneg %p1200
      $region54: #{tpu_custom_call.1} parent=5 // pred_check_branch
        %1203 = sbr.rel (%p1201) target = $region56
      $region55: #{tpu_custom_call.1} parent=5 // pred_region
        %s1204 = ssub.s32 %s14, 2
        // Predicated region
        $region57: #{tpu_custom_call.1} parent=55 // pred_check
          %p1205 = pneg %p151
        $region58: #{tpu_custom_call.1} parent=55 // pred_check_branch
          %1207 = sbr.rel (%p1205) target = $region60
        $region59: #{tpu_custom_call.1} parent=55 // pred_region
          %s1208 = sand.u32 %s136, 1
          %s1209 = scalar_lea.sflag [#allocation5], %s1208
          %s1210 = sand.u32 %s136, 1
          %s1211 = smul.addr %s1210, 64
          %s1212 = scalar_lea.vmem [#allocation6], %s1211
          %1213 = dma.done %s1209, 1024
        $region60: #{tpu_custom_call.1} parent=55 // pred_fallthru
          _
      $region56: #{tpu_custom_call.1} parent=5 // pred_fallthru
        _
    $region6: #{tpu_custom_call.1} parent=1 // loop_footer
      %s18 = sadd.s32 1, %s14
    $region7: #{tpu_custom_call.1} parent=1 // loop_footer_branch
      %13 = sbr.rel target = $region3
    $region8: #{tpu_custom_call.1} parent=1 // loop_exit
      _
    %1214 = vsyncpa [#allocation4], 1
    %s1215 = scalar_lea.sflag [#allocation4], 1
    %1216 = vsyncpa %s1215, 1
    %1217 = vsyncpa [#allocation5], 1
    %s1218 = scalar_lea.sflag [#allocation5], 1
    %1219 = vsyncpa %s1218, 1

</llo_original>
